<compile_context>
chip_gen: v6e
topology: v6e:2x2x1
jax: 0.10.0
libtpu: 0.0.40
codegen_flags: <defaults>
</compile_context>

<pallas_src>
import numpy as np
import jax
import jax.numpy as jnp
from jax.experimental import pallas as pl
from jax.experimental.pallas import tpu as pltpu

BN_EPS = 1e-5
VMEM_LIMIT = 48 * 1024 * 1024   # <= v7x's 64 MiB physical VMEM, ample on v5e/v6e


# ============================ tiling helpers ================================

def pick_time_tile(t):
    for cand in (4096, 2048, 1024, 512, 256, 128):
        if t % cand == 0:
            return cand
    return t                                  # small shapes: single full tile


def overlap_time_tiles(x, tile, halo, axis):
    """Materialize overlapping windows of length tile+halo along `axis`.
    Length along `axis` must be n_tiles*tile + halo.  The tile axis is folded
    into axis 0 so blocks stay <=4-D (index with b*n_tiles + j)."""
    n_tiles = (x.shape[axis] - halo) // tile
    slabs = [jax.lax.slice_in_dim(x, j * tile, j * tile + tile + halo, axis=axis)
             for j in range(n_tiles)]
    xt = jnp.stack(slabs, axis=1)
    return xt.reshape((x.shape[0] * n_tiles,) + xt.shape[2:]), n_tiles


# ============================ Pallas kernels ================================

def make_conv_kernel(k_size, stride, t_tile):
    """Conv1d as a single MXU matmul: K shifted slices stacked along the
    contraction dim, plus per-tile BN partial (sum, sumsq)."""

    def kernel(x_ref, w_ref, y_ref, st_ref):
        x = x_ref[0]                                  # (s, c_in, tt+halo) bf16
        taps = [x[k % stride, :, (k // stride):(k // stride) + t_tile]
                for k in range(k_size)]
        xk = taps[0] if k_size == 1 else jnp.concatenate(taps, axis=0)
        acc = jnp.dot(w_ref[...], xk,                 # (c_out, K*c_in)@(K*c_in, tt)
                      preferred_element_type=jnp.float32)
        y_ref[0] = acc.astype(y_ref.dtype)            # bf16 pre-BN activations
        st_ref[0] = jnp.concatenate(
            [jnp.sum(acc, axis=1, keepdims=True),
             jnp.sum(acc * acc, axis=1, keepdims=True)], axis=1)

    return kernel


def bn_tanh_kernel(y_ref, sc_ref, sh_ref, o_ref):
    # y: (1, C, TT) bf16, scale/shift: (1, C, 1) f32 -> bf16 output
    y = y_ref[...].astype(jnp.float32)
    o_ref[...] = jnp.tanh(y * sc_ref[...] + sh_ref[...]).astype(o_ref.dtype)


def make_wave_loud_kernel(t_tile, c_in):
    """wave_gen (K=7) + loud_gen (K=3) sharing one padded input tile, fused
    with tanh(wave) * mod_sigmoid(loud)."""

    def kernel(x_ref, ww_ref, bw_ref, wl_ref, bl_ref, o_ref):
        x = x_ref[0]                                    # (c_in, tt+6) bf16
        xw = jnp.concatenate([x[:, k:k + t_tile] for k in range(7)], axis=0)
        wave = jnp.dot(ww_ref[...], xw,
                       preferred_element_type=jnp.float32) + bw_ref[...]
        xl = xw[2 * c_in:5 * c_in, :]                   # loud taps == wave taps 2..4
        loud = jnp.dot(wl_ref[...], xl,
                       preferred_element_type=jnp.float32) + bl_ref[...]
        # mod_sigmoid(x) = 2*sigmoid(x)^2.3 + 1e-7 = 2*exp(-2.3*softplus(-x)) + 1e-7
        z = -loud
        sp = jnp.maximum(z, 0.0) + jnp.log(1.0 + jnp.exp(-jnp.abs(z)))
        mod = 2.0 * jnp.exp(-2.3 * sp) + 1e-7
        o_ref[0] = jnp.tanh(wave) * mod

    return kernel


def make_mel_dist_kernel(ft, n_freq_pad, log_eps):
    """Per (row, frame-tile) mel-spectrogram distance: in-kernel framing
    (hop = n_fft/4) -> windowed rDFT (single matmul, Hann folded in) ->
    mel fbank -> partial (MSE, L1(log)) sums.  All f32 for accuracy."""

    def kernel(xc_ref, yc_ref, dft_ref, fb_ref, o_ref):
        def frames(ref):
            c = ref[0]                                  # (FT+3, hop) f32
            return jnp.concatenate(
                [c[0:ft], c[1:ft + 1], c[2:ft + 2], c[3:ft + 3]], axis=1)

        fr = jnp.concatenate([frames(xc_ref), frames(yc_ref)], axis=0)
        spec = jnp.dot(fr, dft_ref[...], preferred_element_type=jnp.float32)
        re = spec[:, :n_freq_pad]
        im = spec[:, n_freq_pad:]
        mag = jnp.sqrt(re * re + im * im)               # |STFT|, power=1
        mel = jnp.dot(mag, fb_ref[...], preferred_element_type=jnp.float32)
        mx = mel[:ft]
        my = mel[ft:]
        diff = mx - my
        sq = jnp.sum(diff * diff, keepdims=True)                  # (1, 1)
        la = jnp.sum(jnp.abs(jnp.log(mx + log_eps) - jnp.log(my + log_eps)),
                     keepdims=True)
        o_ref[...] = jnp.concatenate([sq, la], axis=1).reshape(1, 1, 2)

    return kernel


# ============================ pallas_call wrappers ==========================

def conv_stats(xt, w2, k_size, stride, c_out, t_out, t_tile, n_tiles, bsz):
    c_in = w2.shape[1] // k_size
    halo = (k_size - 1) // stride
    y, stats = pl.pallas_call(
        make_conv_kernel(k_size, stride, t_tile),
        grid=(bsz, n_tiles),
        in_specs=[
            pl.BlockSpec((1, stride, c_in, t_tile + halo),
                         lambda b, j: (b * n_tiles + j, 0, 0, 0)),
            pl.BlockSpec((c_out, k_size * c_in), lambda b, j: (0, 0)),
        ],
        out_specs=[
            pl.BlockSpec((1, c_out, t_tile), lambda b, j: (b, 0, j)),
            pl.BlockSpec((1, c_out, 2), lambda b, j: (b * n_tiles + j, 0, 0)),
        ],
        out_shape=[
            jax.ShapeDtypeStruct((bsz, c_out, t_out), jnp.bfloat16),
            jax.ShapeDtypeStruct((bsz * n_tiles, c_out, 2), jnp.float32),
        ],
        compiler_params=pltpu.CompilerParams(
            dimension_semantics=("parallel", "parallel"),
            vmem_limit_bytes=VMEM_LIMIT),
    )(xt, w2)
    return y, stats


def bn_tanh(y, scale, shift):
    # TODO(synk): could be fused into the next layer's conv tile-load (needs a
    # zero-mask for the conv padding region); kept separate but bf16 in/out.
    bsz, c, t = y.shape
    tt = pick_time_tile(t)
    return pl.pallas_call(
        bn_tanh_kernel,
        grid=(bsz, t // tt),
        in_specs=[
            pl.BlockSpec((1, c, tt), lambda b, j: (b, 0, j)),
            pl.BlockSpec((1, c, 1), lambda b, j: (0, 0, 0)),
            pl.BlockSpec((1, c, 1), lambda b, j: (0, 0, 0)),
        ],
        out_specs=pl.BlockSpec((1, c, tt), lambda b, j: (b, 0, j)),
        out_shape=jax.ShapeDtypeStruct((bsz, c, t), jnp.bfloat16),
        compiler_params=pltpu.CompilerParams(
            dimension_semantics=("parallel", "parallel"),
            vmem_limit_bytes=VMEM_LIMIT),
    )(y, scale, shift)


def wave_loud(h, wg, lg, n_band, t_keep):
    bsz, c_in, t = h.shape
    tt = pick_time_tile(t)
    xp = jnp.pad(h, ((0, 0), (0, 0), (3, 3)))           # shared K=7 padding
    xt, n_tiles = overlap_time_tiles(xp, tt, 6, axis=2)
    c_pad = wg['w2'].shape[0]
    out = pl.pallas_call(
        make_wave_loud_kernel(tt, c_in),
        grid=(bsz, n_tiles),
        in_specs=[
            pl.BlockSpec((1, c_in, tt + 6), lambda b, j: (b * n_tiles + j, 0, 0)),
            pl.BlockSpec((c_pad, 7 * c_in), lambda b, j: (0, 0)),
            pl.BlockSpec((c_pad, 1), lambda b, j: (0, 0)),
            pl.BlockSpec((c_pad, 3 * c_in), lambda b, j: (0, 0)),
            pl.BlockSpec((c_pad, 1), lambda b, j: (0, 0)),
        ],
        out_specs=pl.BlockSpec((1, c_pad, tt), lambda b, j: (b, 0, j)),
        out_shape=jax.ShapeDtypeStruct((bsz, c_pad, t), jnp.float32),
        compiler_params=pltpu.CompilerParams(
            dimension_semantics=("parallel", "parallel"),
            vmem_limit_bytes=VMEM_LIMIT),
    )(xt, wg['w2'], wg['bias'], lg['w2'], lg['bias'])
    return out[:, :n_band, :t_keep]


def mel_distance(xa, ya, consts, n_fft, log_eps):
    dftm, fbank = consts
    hop = n_fft // 4
    n_rows = xa.shape[0]
    n_mels = fbank.shape[1]
    n_freq_pad = fbank.shape[0]

    def prep(a):
        ap = jnp.pad(a, ((0, 0), (n_fft // 2, n_fft // 2)), mode='reflect')
        n_frames = (ap.shape[1] - n_fft) // hop + 1
        ft = n_frames if n_frames < 128 else 128
        n_frames_pad = ((n_frames + ft - 1) // ft) * ft   # zero frames add 0 loss
        need = (n_frames_pad + 3) * hop
        if need > ap.shape[1]:
            ap = jnp.pad(ap, ((0, 0), (0, need - ap.shape[1])))
        else:
            ap = ap[:, :need]
        ap = ap.reshape(n_rows, n_frames_pad + 3, hop).astype(jnp.float32)
        xt, n_tiles = overlap_time_tiles(ap, ft, 3, axis=1)
        return xt, n_frames, ft, n_tiles

    xc, n_frames, ft, n_tiles = prep(xa)
    yc, _, _, _ = prep(ya)

    out = pl.pallas_call(
        make_mel_dist_kernel(ft, n_freq_pad, log_eps),
        grid=(n_rows * n_tiles,),
        in_specs=[
            pl.BlockSpec((1, ft + 3, hop), lambda n: (n, 0, 0)),
            pl.BlockSpec((1, ft + 3, hop), lambda n: (n, 0, 0)),
            pl.BlockSpec(dftm.shape, lambda n: (0, 0)),
            pl.BlockSpec(fbank.shape, lambda n: (0, 0)),
        ],
        out_specs=pl.BlockSpec((1, 1, 2), lambda n: (n, 0, 0)),
        out_shape=jax.ShapeDtypeStruct((n_rows * n_tiles, 1, 2), jnp.float32),
        compiler_params=pltpu.CompilerParams(
            dimension_semantics=("parallel",),
            vmem_limit_bytes=VMEM_LIMIT),
    )(xc, yc, dftm, fbank)

    sums = jnp.sum(out.reshape(-1, 2), axis=0)
    cnt = jnp.float32(n_rows * n_frames * n_mels)
    return sums[0] / cnt + sums[1] / cnt                 # MSE + L1(log)


# ============================ JAX layout glue ===============================

def upsample_zeros(x, stride):
    b, c, t = x.shape
    t_up = (t - 1) * stride + 1
    return jnp.zeros((b, c, t_up), x.dtype).at[:, :, ::stride].set(x)


def conv_bn_tanh_layer(h, layer):
    # h: (B, C_in, T) bf16 -> (B, C_out, T_out) bf16
    if layer['kind'] == 'convT':
        # TODO(synk): real ConvTranspose1d checkpoints need a time-flip and
        # in/out channel swap; the synthetic init uses the equivalent-conv
        # weight directly (zero-upsample + stride-1 conv).
        h = upsample_zeros(h, layer['stride'])
        s_eff, pad_eff = 1, layer['k'] - 1 - layer['pad']
    else:
        s_eff, pad_eff = layer['stride'], layer['pad']
    k = layer['k']
    bsz, c_in, t = h.shape
    t_out = (t + 2 * pad_eff - k) // s_eff + 1
    tt = pick_time_tile(t_out)
    halo = (k - 1) // s_eff

    # Polyphase decomposition (pure reshape, same byte count as the input --
    # no im2col K-fold inflation) + overlapping time tiles for the halo.
    L = t_out + halo
    total = s_eff * L
    end_pad = total - t - pad_eff
    if end_pad >= 0:
        xp = jnp.pad(h, ((0, 0), (0, 0), (pad_eff, end_pad)))
    else:
        xp = jnp.pad(h, ((0, 0), (0, 0), (pad_eff, 0)))[:, :, :total]
    xp = xp.reshape(bsz, c_in, L, s_eff).transpose(0, 3, 1, 2)   # (B, s, C, L)
    xt, n_tiles = overlap_time_tiles(xp, tt, halo, axis=3)

    c_out = layer['w2'].shape[0]
    y, stats = conv_stats(xt, layer['w2'], k, s_eff, c_out, t_out,
                          tt, n_tiles, bsz)

    # Training-mode (biased) batch statistics from the per-tile partial sums,
    # folded into one per-channel scale/shift for the parallel bn_tanh pass.
    # TODO(synk): switch to Welford-style (count, mean, M2) merging if f32
    # sum/sumsq cancellation matters for very long B*T.
    tot = jnp.sum(stats, axis=0)                         # (c_out, 2)
    n = jnp.float32(bsz * t_out)
    mean = tot[:, 0] / n
    var = jnp.maximum(tot[:, 1] / n - mean * mean, 0.0)
    rstd = jax.lax.rsqrt(var + BN_EPS)
    scale = (layer['gamma'] * rstd)[None, :, None]
    shift = (layer['beta'] - mean * layer['gamma'] * rstd)[None, :, None]
    return bn_tanh(y, scale, shift)


def vq_quantize(z, codebook, commitment_cost):
    # VQ bottleneck is tiny (B*T' x 512 x 16); left as plain-JAX glue.
    b, d, t = z.shape
    zf = jnp.transpose(z, (0, 2, 1)).reshape(-1, d)
    dist = (jnp.sum(zf * zf, axis=1, keepdims=True)
            + jnp.sum(codebook * codebook, axis=1)[None, :]
            - 2.0 * zf @ codebook.T)
    idx = jnp.argmin(dist, axis=1)
    q = codebook[idx]
    e_loss = jnp.mean(jnp.square(jax.lax.stop_gradient(q) - zf))
    q_loss = jnp.mean(jnp.square(q - jax.lax.stop_gradient(zf)))
    vq_loss = q_loss + commitment_cost * e_loss
    q = zf + jax.lax.stop_gradient(q - zf)               # straight-through
    q = q.reshape(b, t, d).transpose(0, 2, 1)
    return q, vq_loss


# ============================ spectral constants ============================

def melscale_fbanks(n_freqs, f_min, f_max, n_mels, sample_rate):
    # torchaudio.functional.melscale_fbanks (mel_scale='htk', norm=None)
    all_freqs = np.linspace(0.0, sample_rate // 2, n_freqs)
    m_min = 2595.0 * np.log10(1.0 + f_min / 700.0)
    m_max = 2595.0 * np.log10(1.0 + f_max / 700.0)
    m_pts = np.linspace(m_min, m_max, n_mels + 2)
    f_pts = 700.0 * (10.0 ** (m_pts / 2595.0) - 1.0)
    f_diff = f_pts[1:] - f_pts[:-1]
    slopes = f_pts[None, :] - all_freqs[:, None]
    down = -slopes[:, :-2] / f_diff[:-1]
    up = slopes[:, 2:] / f_diff[1:]
    return np.maximum(0.0, np.minimum(down, up))          # (n_freqs, n_mels)


def spectral_constants(n_fft, sample_rate, n_mels, lane_pad=128):
    n_freq = n_fft // 2 + 1
    n = np.arange(n_fft)
    win = 0.5 * (1.0 - np.cos(2.0 * np.pi * n / n_fft))   # periodic hann
    ang = 2.0 * np.pi * np.outer(n, np.arange(n_freq)) / n_fft
    cosm = np.zeros((n_fft, lane_pad), np.float32)
    sinm = np.zeros((n_fft, lane_pad), np.float32)
    cosm[:, :n_freq] = win[:, None] * np.cos(ang)         # window folded in
    sinm[:, :n_freq] = win[:, None] * np.sin(ang)
    dft = np.concatenate([cosm, sinm], axis=1)            # (n_fft, 2*128)
    fbank = np.zeros((lane_pad, n_mels), np.float32)
    fbank[:n_freq] = melscale_fbanks(n_freq, 0.0, float(sample_rate // 2),
                                     n_mels, sample_rate)
    return (jnp.asarray(dft, jnp.float32),
            jnp.asarray(fbank, jnp.float32))


# ============================ parameters ====================================

def _xavier(key, shape, fan_in, fan_out):
    bound = float(np.sqrt(6.0 / (fan_in + fan_out)))
    return jax.random.uniform(key, shape, jnp.float32, -bound, bound)


def build_params(key, n_band, hidden_dim=16, num_embeddings=512):
    enc_cfg = [
        ('conv', n_band,       n_band * 4,  7,  1, 3),
        ('conv', n_band * 4,   n_band * 8,  11, 5, 5),
        ('conv', n_band * 8,   n_band * 16, 9,  4, 4),
        ('conv', n_band * 16,  n_band * 32, 7,  3, 3),
        ('conv', n_band * 32,  hidden_dim,  1,  1, 0),
    ]
    dec_cfg = [
        ('conv',  hidden_dim,  n_band * 32, 1,  1, 0),
        ('convT', n_band * 32, n_band * 16, 6,  3, 1),
        ('convT', n_band * 16, n_band * 8,  8,  4, 2),
        ('convT', n_band * 8,  n_band * 4,  10, 5, 2),
    ]
    keys = jax.random.split(key, len(enc_cfg) + len(dec_cfg) + 3)
    ki = 0

    def bn_layer(kind, c_in, c_out, ksz, stride, pad):
        nonlocal ki
        w = _xavier(keys[ki], (c_out, c_in, ksz), c_in * ksz, c_out * ksz)
        ki += 1
        # (c_out, c_in, K) -> (c_out, K*c_in): tap-major contraction stacking.
        # Conv bias before BatchNorm is a mathematical no-op -> dropped.
        w2 = jnp.transpose(w, (0, 2, 1)).reshape(c_out, ksz * c_in)
        return dict(kind=kind, k=ksz, stride=stride, pad=pad,
                    w2=w2.astype(jnp.bfloat16),
                    gamma=jnp.ones((c_out,), jnp.float32),
                    beta=jnp.zeros((c_out,), jnp.float32))

    def head_layer(c_in, c_out, ksz, c_pad=8):
        nonlocal ki
        w = _xavier(keys[ki], (c_out, c_in, ksz), c_in * ksz, c_out * ksz)
        ki += 1
        wp = jnp.zeros((c_pad, c_in, ksz), jnp.float32).at[:c_out].set(w)
        w2 = jnp.transpose(wp, (0, 2, 1)).reshape(c_pad, ksz * c_in)
        return dict(k=ksz, w2=w2.astype(jnp.bfloat16),
                    bias=jnp.zeros((c_pad, 1), jnp.float32))

    params = {
        'encoder': [bn_layer(*cfg) for cfg in enc_cfg],
        'decoder': [bn_layer(*cfg) for cfg in dec_cfg],
        'wave_gen': head_layer(n_band * 4, n_band, 7),
        'loud_gen': head_layer(n_band * 4, n_band, 3),
        'codebook': jax.random.uniform(
            keys[ki], (num_embeddings, hidden_dim), jnp.float32,
            -1.0 / num_embeddings, 1.0 / num_embeddings),
    }
    return params


# ============================ forward pass ==================================

def vqae_forward(x, params, spec_consts, stft_scales, log_eps,
                 commitment_cost=0.1):
    # x: (B, n_band, T) multiband audio.
    # TODO(synk): PQMF analysis/inverse and the 48 kHz melspec + SpecEncoder +
    # mapper branch (and hence spectral_loss) are not defined in the reference
    # source; the model operates on the multiband signal with z = z_audio.
    mb_audio = x
    bsz, n_band, t_in = x.shape

    h = x.astype(jnp.bfloat16)
    for layer in params['encoder']:
        h = conv_bn_tanh_layer(h, layer)
    z = h.astype(jnp.float32)                            # (B, 16, T//60)

    z_q, vq_loss = vq_quantize(z, params['codebook'], commitment_cost)

    h = z_q.astype(jnp.bfloat16)
    for layer in params['decoder']:
        h = conv_bn_tanh_layer(h, layer)

    x_rec = wave_loud(h, params['wave_gen'], params['loud_gen'],
                      n_band, t_in)                      # (B, n_band, T) f32

    input_audio = mb_audio.reshape(bsz * n_band, t_in)
    output_audio = x_rec.reshape(bsz * n_band, t_in)

    audio_loss = jnp.zeros((), jnp.float32)
    for scale, consts in zip(stft_scales, spec_consts):
        audio_loss = audio_loss + mel_distance(input_audio, output_audio,
                                               consts, scale, log_eps)

    return x_rec, audio_loss, vq_loss


# ============================ demo ==========================================

if __name__ == "__main__":
    B, N_BAND, T = 2, 4, 240          # T divisible by 5*4*3 encoder strides
    SAMPLE_RATE = 16000
    STFT_SCALES = (64, 128)
    N_MELS = 16
    LOG_EPS = 1e-7

    key = jax.random.PRNGKey(0)
    k_x, k_p = jax.random.split(key)
    x = jax.random.normal(k_x, (B, N_BAND, T), jnp.float32)

    params = build_params(k_p, N_BAND, hidden_dim=16)
    spec_consts = [spectral_constants(s, SAMPLE_RATE, N_MELS)
                   for s in STFT_SCALES]

    x_rec, audio_loss, vq_loss = vqae_forward(x, params, spec_consts,
                                              STFT_SCALES, LOG_EPS)
    jax.block_until_ready((x_rec, audio_loss, vq_loss))

    assert x_rec.shape == (B, N_BAND, T), x_rec.shape
    assert bool(jnp.isfinite(audio_loss)), audio_loss
    assert bool(jnp.isfinite(vq_loss)), vq_loss
    print("KERNEL_OK")
</pallas_src>

<mosaic_0001>
module attributes {stable_mosaic.version = 11 : i64} {
  func.func @kernel(%arg0: i32, %arg1: i32, %arg2: memref<1x1x4x246xbf16, #tpu.memory_space<vmem>>, %arg3: memref<16x28xbf16, #tpu.memory_space<vmem>>, %arg4: memref<1x16x240xbf16, #tpu.memory_space<vmem>>, %arg5: memref<1x16x2xf32, #tpu.memory_space<vmem>>) attributes {dimension_semantics = [#tpu.dimension_semantics<parallel>, #tpu.dimension_semantics<parallel>], iteration_bounds = array<i64: 2, 1>, scalar_prefetch = 0 : i64, scratch_operands = 0 : i64, tpu.core_type = #tpu.core_type<tc>, window_params = [{transform_indices = @transform_0, window_bounds = array<i64: 1, 1, 4, 246>}, {pipeline_mode = #tpu.pipeline_mode<synchronous>, transform_indices = @transform_1, window_bounds = array<i64: 16, 28>}, {transform_indices = @transform_2, window_bounds = array<i64: 1, 16, 240>}, {transform_indices = @transform_3, window_bounds = array<i64: 1, 16, 2>}]} {
    %c0 = arith.constant 0 : index
    %c0_0 = arith.constant 0 : index
    %c0_1 = arith.constant 0 : index
    %c0_2 = arith.constant 0 : index
    %0 = vector.load %arg2[%c0, %c0_0, %c0_1, %c0_2] : memref<1x1x4x246xbf16, #tpu.memory_space<vmem>>, vector<1x1x4x246xbf16>
    %1 = vector.shape_cast %0 : vector<1x1x4x246xbf16> to vector<1x4x246xbf16>
    %2 = vector.extract_strided_slice %1 {offsets = [0, 0, 0], sizes = [1, 4, 240], strides = [1, 1, 1]} : vector<1x4x246xbf16> to vector<1x4x240xbf16>
    %3 = vector.shape_cast %2 : vector<1x4x240xbf16> to vector<4x240xbf16>
    %4 = vector.extract_strided_slice %1 {offsets = [0, 0, 1], sizes = [1, 4, 240], strides = [1, 1, 1]} : vector<1x4x246xbf16> to vector<1x4x240xbf16>
    %5 = vector.shape_cast %4 : vector<1x4x240xbf16> to vector<4x240xbf16>
    %6 = vector.extract_strided_slice %1 {offsets = [0, 0, 2], sizes = [1, 4, 240], strides = [1, 1, 1]} : vector<1x4x246xbf16> to vector<1x4x240xbf16>
    %7 = vector.shape_cast %6 : vector<1x4x240xbf16> to vector<4x240xbf16>
    %8 = vector.extract_strided_slice %1 {offsets = [0, 0, 3], sizes = [1, 4, 240], strides = [1, 1, 1]} : vector<1x4x246xbf16> to vector<1x4x240xbf16>
    %9 = vector.shape_cast %8 : vector<1x4x240xbf16> to vector<4x240xbf16>
    %10 = vector.extract_strided_slice %1 {offsets = [0, 0, 4], sizes = [1, 4, 240], strides = [1, 1, 1]} : vector<1x4x246xbf16> to vector<1x4x240xbf16>
    %11 = vector.shape_cast %10 : vector<1x4x240xbf16> to vector<4x240xbf16>
    %12 = vector.extract_strided_slice %1 {offsets = [0, 0, 5], sizes = [1, 4, 240], strides = [1, 1, 1]} : vector<1x4x246xbf16> to vector<1x4x240xbf16>
    %13 = vector.shape_cast %12 : vector<1x4x240xbf16> to vector<4x240xbf16>
    %14 = vector.extract_strided_slice %1 {offsets = [0, 0, 6], sizes = [1, 4, 240], strides = [1, 1, 1]} : vector<1x4x246xbf16> to vector<1x4x240xbf16>
    %15 = vector.shape_cast %14 : vector<1x4x240xbf16> to vector<4x240xbf16>
    %16 = tpu.concatenate %3, %5, %7, %9, %11, %13, %15 in 0 : vector<4x240xbf16>, vector<4x240xbf16>, vector<4x240xbf16>, vector<4x240xbf16>, vector<4x240xbf16>, vector<4x240xbf16>, vector<4x240xbf16> -> vector<28x240xbf16>
    %c0_3 = arith.constant 0 : index
    %c0_4 = arith.constant 0 : index
    %17 = vector.load %arg3[%c0_3, %c0_4] : memref<16x28xbf16, #tpu.memory_space<vmem>>, vector<16x28xbf16>
    %cst = arith.constant dense<0.000000e+00> : vector<16x240xf32>
    %18 = tpu.matmul %17, %16, %cst {dimension_numbers = #tpu.dot_dimension_numbers<[1], [0], [0], [1], [0, 0, 1, 1], [], []>} : vector<16x28xbf16>, vector<28x240xbf16>, vector<16x240xf32> -> vector<16x240xf32>
    %19 = arith.truncf %18 : vector<16x240xf32> to vector<16x240xbf16>
    %c0_5 = arith.constant 0 : index
    %c0_6 = arith.constant 0 : index
    %c0_7 = arith.constant 0 : index
    %20 = vector.load %arg4[%c0_5, %c0_6, %c0_7] : memref<1x16x240xbf16, #tpu.memory_space<vmem>>, vector<1x16x240xbf16>
    %21 = vector.shape_cast %20 : vector<1x16x240xbf16> to vector<16x240xbf16>
    %22 = vector.shape_cast %19 : vector<16x240xbf16> to vector<1x16x240xbf16>
    tpu.vector_store %arg4[%c0_5, %c0_6, %c0_7], %22 {strides = array<i32>} : memref<1x16x240xbf16, #tpu.memory_space<vmem>>, vector<1x16x240xbf16>,
    %cst_8 = arith.constant dense<0.000000e+00> : vector<16xf32>
    %23 = vector.multi_reduction <add>, %18, %cst_8 [1] : vector<16x240xf32> to vector<16xf32>
    %24 = vector.shape_cast %23 : vector<16xf32> to vector<16x1xf32>
    %25 = arith.mulf %18, %18 : vector<16x240xf32>
    %cst_9 = arith.constant dense<0.000000e+00> : vector<16xf32>
    %26 = vector.multi_reduction <add>, %25, %cst_9 [1] : vector<16x240xf32> to vector<16xf32>
    %27 = vector.shape_cast %26 : vector<16xf32> to vector<16x1xf32>
    %28 = tpu.concatenate %24, %27 in 1 : vector<16x1xf32>, vector<16x1xf32> -> vector<16x2xf32>
    %c0_10 = arith.constant 0 : index
    %c0_11 = arith.constant 0 : index
    %c0_12 = arith.constant 0 : index
    %29 = vector.load %arg5[%c0_10, %c0_11, %c0_12] : memref<1x16x2xf32, #tpu.memory_space<vmem>>, vector<1x16x2xf32>
    %30 = vector.shape_cast %29 : vector<1x16x2xf32> to vector<16x2xf32>
    %31 = vector.shape_cast %28 : vector<16x2xf32> to vector<1x16x2xf32>
    tpu.vector_store %arg5[%c0_10, %c0_11, %c0_12], %31 {strides = array<i32>} : memref<1x16x2xf32, #tpu.memory_space<vmem>>, vector<1x16x2xf32>,
    return
  }
  func.func @transform_0(%arg0: i32, %arg1: i32) -> (i32, i32, i32, i32) {
    %c1_i32 = arith.constant 1 : i32
    %0 = arith.muli %arg0, %c1_i32 : i32
    %1 = arith.addi %0, %arg1 : i32
    %c0_i32 = arith.constant 0 : i32
    %c0_i32_0 = arith.constant 0 : i32
    %c0_i32_1 = arith.constant 0 : i32
    %c0_i32_2 = arith.constant 0 : i32
    return %1, %c0_i32, %c0_i32_0, %c0_i32_1 : i32, i32, i32, i32
  }
  func.func @transform_1(%arg0: i32, %arg1: i32) -> (i32, i32) {
    %c0_i32 = arith.constant 0 : i32
    %c0_i32_0 = arith.constant 0 : i32
    %c0_i32_1 = arith.constant 0 : i32
    return %c0_i32, %c0_i32_0 : i32, i32
  }
  func.func @transform_2(%arg0: i32, %arg1: i32) -> (i32, i32, i32) {
    %c0_i32 = arith.constant 0 : i32
    %c0_i32_0 = arith.constant 0 : i32
    return %arg0, %c0_i32, %arg1 : i32, i32, i32
  }
  func.func @transform_3(%arg0: i32, %arg1: i32) -> (i32, i32, i32) {
    %c1_i32 = arith.constant 1 : i32
    %0 = arith.muli %arg0, %c1_i32 : i32
    %1 = arith.addi %0, %arg1 : i32
    %c0_i32 = arith.constant 0 : i32
    %c0_i32_0 = arith.constant 0 : i32
    %c0_i32_1 = arith.constant 0 : i32
    return %1, %c0_i32, %c0_i32_0 : i32, i32, i32
  }
}

</mosaic_0001>

<llo_original>
// kernel: tpu_custom_call.1
$region0: #{tpu_custom_call.1}
  #allocation0 [shape = 'u32[]', space=smem, size = 0x4, offset = 0x4, fixed_abs, tag = 'smem constant byte address 0x4 - core index']
  #allocation1 [shape = 'u32[144,128]{1,0:T(1,128)}', space=vmem, size = 0x12000, scoped, tag = 'internal scratch']
  %s0 = inlined_call_operand.hbm [shape: bf16[2,1,4,246], index: 0, kind: input, shape index: {}]
  %s1 = inlined_call_operand.hbm [shape: bf16[16,28], index: 1, kind: input, shape index: {}]
  %s2 = inlined_call_operand.hbm [shape: bf16[2,16,240], index: 2, kind: output, shape index: {0}]
  %s3 = inlined_call_operand.vmem [shape: f32[2,16,2], index: 3, kind: output, shape index: {1}]
  %4 = xla_tuple %s2, %s3
  %s5 = sld [smem:[#allocation0]]
  $region57: #{tpu_custom_call.1} parent=0
    _
  %s7 = ssub.s32 1, %s5
  %s8 = scalar_select 0, %s7, %s5
  $region1: #{tpu_custom_call.1} parent=0
    #allocation2 [shape = 'u8[4096]{0}', space=vmem, size = 0x1000, scoped, tag = 'input window, operand 0']
    #allocation3 [shape = 's32[2]{0}', space=sflag, size = 0x8, scoped, tag = 'scoped memory for tpu_custom_call.1']
    #allocation4 [shape = 's32[2]{0}', space=sflag, size = 0x8, scoped, tag = 'scoped memory for tpu_custom_call.1']
    #allocation5 [shape = 'u8[4096]{0}', space=vmem, size = 0x1000, scoped, tag = 'input window, operand 1, single buffered']
    #allocation6 [shape = 's32[1]{0}', space=sflag, size = 0x4, scoped, tag = 'scoped memory for tpu_custom_call.1']
    #allocation7 [shape = 'u8[16384]{0}', space=vmem, size = 0x4000, scoped, tag = 'output window, operand 0']
    %9 = vsyncpa [#allocation3], 0
    %s10 = scalar_lea.sflag [#allocation3], 1
    %11 = vsyncpa %s10, 0
    %12 = vsyncpa [#allocation6], 0
    %13 = vsyncpa [#allocation4], 0
    %s14 = scalar_lea.sflag [#allocation4], 1
    %15 = vsyncpa %s14, 0
    loop: start=0, step=1, limit=4
    $region2: #{tpu_custom_call.1} parent=1 // loop_pre_header
      _
    $region3: #{tpu_custom_call.1} parent=1 // loop_header
      %s17 = sphi 0, %s21
      %p18 = scmp.ge.s32.totalorder %s17, 4
      %s24 = sphi 0, %s36
      %s25 = sphi 0, %s32
      %s26 = sphi 0, %s24
      %s27 = sphi 0, %s25
      %s28 = sphi 0, %s26
      %s29 = sphi 0, %s27
      %s41 = sphi 0, %s43
      %s44 = sphi 0, %s41
      %s45 = sphi 0, %s44
      %s61 = sphi 0, %s45
      %s65 = sphi 0, %s65
      %s67 = sphi 0, %s65
      %s68 = sphi 0, %s67
      %s82 = sphi 0, %s68
      %s90 = sphi 0, %s92
      %s93 = sphi 0, %s90
      %s94 = sphi 0, %s93
      %s110 = sphi 0, %s94
      %s118 = sphi 0, %s120
      %s121 = sphi 0, %s118
      %s122 = sphi 0, %s121
      %s138 = sphi 0, %s122
    $region4: #{tpu_custom_call.1} parent=1 // loop_header_branch
      %20 = sbr.rel (%p18) target = $region8
    $region5: #{tpu_custom_call.1} parent=1 // loop_body
      %s22 = ssub.s32 %s17, 1
      %s23 = ssub.s32 %s17, 2
      %s30 = sadd.s32 1, %s25
      %p31 = scmp.ge.s32.totalorder %s30, 1
      %s32 = scalar_select %p31, 0, %s30
      %s33 = sadd.s32 1, %s24
      %s34 = scalar_select %p31, %s33, %s24
      %p35 = scmp.ge.s32.totalorder %s34, 2
      %s36 = scalar_select %p35, 0, %s34
      %s37 = sadd.s32 %s24, %s25
      %s38 = sadd.s32 %s36, %s32
      %s39 = ssub.s32 %s37, %s38
      %p40 = scmp.eq.s32.totalorder %s39, 0
      %s42 = sadd.s32 %s41, 1
      %s43 = scalar_select %p40, %s41, %s42
      %p46 = pneg %p40
      %p47 = scmp.eq.s32.totalorder %s17, 1
      %p48 = por %p46, %p47
      %p49 = scmp.ne.s32.totalorder %s41, %s44
      %p50 = scmp.eq.s32.totalorder %s17, 0
      %p51 = por %p49, %p50
      %p52 = scmp.ne.s32.totalorder %s41, %s44
      %p53 = scmp.eq.s32.totalorder %s22, 1
      %p54 = por %p52, %p53
      %p55 = scmp.ne.s32.totalorder %s44, %s45
      %p56 = scmp.eq.s32.totalorder %s22, 0
      %p57 = por %p55, %p56
      %p58 = scmp.ne.s32.totalorder %s44, %s45
      %p59 = scmp.eq.s32.totalorder %s23, 1
      %p60 = por %p58, %p59
      %p62 = scmp.ne.s32.totalorder %s45, %s61
      %p63 = scmp.eq.s32.totalorder %s23, 0
      %p64 = por %p62, %p63
      %s66 = sadd.s32 %s65, 1
      %p69 = scmp.eq.s32.totalorder %s17, 1
      %p70 = scmp.ne.s32.totalorder %s65, %s67
      %p71 = scmp.eq.s32.totalorder %s17, 0
      %p72 = por %p70, %p71
      %p73 = scmp.ne.s32.totalorder %s65, %s67
      %p74 = scmp.eq.s32.totalorder %s22, 1
      %p75 = por %p73, %p74
      %p76 = scmp.ne.s32.totalorder %s67, %s68
      %p77 = scmp.eq.s32.totalorder %s22, 0
      %p78 = por %p76, %p77
      %p79 = scmp.ne.s32.totalorder %s67, %s68
      %p80 = scmp.eq.s32.totalorder %s23, 1
      %p81 = por %p79, %p80
      %p83 = scmp.ne.s32.totalorder %s68, %s82
      %p84 = scmp.eq.s32.totalorder %s23, 0
      %p85 = por %p83, %p84
      %s86 = ssub.s32 %s24, %s36
      %s87 = ssub.s32 %s25, %s32
      %s88 = sor.u32 %s86, %s87
      %p89 = scmp.eq.s32.totalorder %s88, 0
      %s91 = sadd.s32 %s90, 1
      %s92 = scalar_select %p89, %s90, %s91
      %p95 = pneg %p89
      %p96 = scmp.eq.s32.totalorder %s17, 1
      %p97 = por %p95, %p96
      %p98 = scmp.ne.s32.totalorder %s90, %s93
      %p99 = scmp.eq.s32.totalorder %s17, 0
      %p100 = por %p98, %p99
      %p101 = scmp.ne.s32.totalorder %s90, %s93
      %p102 = scmp.eq.s32.totalorder %s22, 1
      %p103 = por %p101, %p102
      %p104 = scmp.ne.s32.totalorder %s93, %s94
      %p105 = scmp.eq.s32.totalorder %s22, 0
      %p106 = por %p104, %p105
      %p107 = scmp.ne.s32.totalorder %s93, %s94
      %p108 = scmp.eq.s32.totalorder %s23, 1
      %p109 = por %p107, %p108
      %p111 = scmp.ne.s32.totalorder %s94, %s110
      %p112 = scmp.eq.s32.totalorder %s23, 0
      %p113 = por %p111, %p112
      %s114 = sadd.s32 %s24, %s25
      %s115 = sadd.s32 %s36, %s32
      %s116 = ssub.s32 %s114, %s115
      %p117 = scmp.eq.s32.totalorder %s116, 0
      %s119 = sadd.s32 %s118, 1
      %s120 = scalar_select %p117, %s118, %s119
      %p123 = pneg %p117
      %p124 = scmp.eq.s32.totalorder %s17, 1
      %p125 = por %p123, %p124
      %p126 = scmp.ne.s32.totalorder %s118, %s121
      %p127 = scmp.eq.s32.totalorder %s17, 0
      %p128 = por %p126, %p127
      %p129 = scmp.ne.s32.totalorder %s118, %s121
      %p130 = scmp.eq.s32.totalorder %s22, 1
      %p131 = por %p129, %p130
      %p132 = scmp.ne.s32.totalorder %s121, %s122
      %p133 = scmp.eq.s32.totalorder %s22, 0
      %p134 = por %p132, %p133
      %p135 = scmp.ne.s32.totalorder %s121, %s122
      %p136 = scmp.eq.s32.totalorder %s23, 1
      %p137 = por %p135, %p136
      %p139 = scmp.ne.s32.totalorder %s122, %s138
      %p140 = scmp.eq.s32.totalorder %s23, 0
      %p141 = por %p139, %p140
      %p142 = scmp.le.s32.totalorder 1, %s17
      %p143 = scmp.lt.s32.totalorder %s17, 3
      %p144 = pnand %p142, %p143
      %p145 = pneg %p144
      // Predicated region
      $region9: #{tpu_custom_call.1} parent=5 // pred_check
        _
      $region10: #{tpu_custom_call.1} parent=5 // pred_check_branch
        %147 = sbr.rel (%p144) target = $region12
      $region11: #{tpu_custom_call.1} parent=5 // pred_region
        %s148 = ssub.s32 %s17, 1
        // Predicated region
        $region13: #{tpu_custom_call.1} parent=11 // pred_check
          %p149 = pneg %p78
        $region14: #{tpu_custom_call.1} parent=11 // pred_check_branch
          %151 = sbr.rel (%p149) target = $region16
        $region15: #{tpu_custom_call.1} parent=11 // pred_region
          %s153 = ssub.s32 128, 128
          %154 = vsyncadd [#allocation6], %s153
          %s155 = sshll.u32 [#allocation5], 4
          %s156 = int_to_ptr.vmem [resolvable:$true] %s155
          %161 = dma.hbm_to_vmem [thread:$0]  %s1, 128, %s156, [#allocation6], 64, 64, 4
        $region16: #{tpu_custom_call.1} parent=11 // pred_fallthru
          _
      $region12: #{tpu_custom_call.1} parent=5 // pred_fallthru
        _
      %p162 = scmp.lt.s32.totalorder %s17, 2
      // Predicated region
      $region17: #{tpu_custom_call.1} parent=5 // pred_check
        %p163 = pneg %p162
      $region18: #{tpu_custom_call.1} parent=5 // pred_check_branch
        %165 = sbr.rel (%p163) target = $region20
      $region19: #{tpu_custom_call.1} parent=5 // pred_region
        // Predicated region
        $region21: #{tpu_custom_call.1} parent=19 // pred_check
          %p166 = pneg %p51
        $region22: #{tpu_custom_call.1} parent=19 // pred_check_branch
          %168 = sbr.rel (%p166) target = $region24
        $region23: #{tpu_custom_call.1} parent=19 // pred_region
          %s169 = sand.u32 %s41, 1
          %s170 = scalar_lea.sflag [#allocation3], %s169
          %s171 = sand.u32 %s41, 1
          %s172 = smul.addr %s171, 4
          %s173 = scalar_lea.vmem [#allocation2], %s172
          %s174 = sadd.s32 %s24, %s25
          %s176 = ssub.s32 64, 64
          %177 = vsyncadd %s170, %s176
          %s178 = smul.addr %s174, 2
          %s179 = smul.addr %s178, 32
          %s180 = scalar_lea.hbm %s0, %s179
          %s182 = sshll.u32 %s173, 4
          %s183 = int_to_ptr.vmem [resolvable:$true] %s182
          %185 = dma.hbm_to_vmem [thread:$0]  %s180, 64, %s183, %s170
        $region24: #{tpu_custom_call.1} parent=19 // pred_fallthru
          _
      $region20: #{tpu_custom_call.1} parent=5 // pred_fallthru
        _
      %p186 = scmp.le.s32.totalorder 1, %s17
      %p187 = scmp.lt.s32.totalorder %s17, 3
      %p188 = pnand %p186, %p187
      %p189 = pneg %p188
      // Predicated region
      $region25: #{tpu_custom_call.1} parent=5 // pred_check
        _
      $region26: #{tpu_custom_call.1} parent=5 // pred_check_branch
        %191 = sbr.rel (%p188) target = $region28
      $region27: #{tpu_custom_call.1} parent=5 // pred_region
        %s192 = ssub.s32 %s17, 1
        %s193 = sand.u32 %s44, 1
        %s194 = scalar_lea.sflag [#allocation3], %s193
        %s195 = sand.u32 %s44, 1
        %s196 = smul.addr %s195, 4
        %s197 = scalar_lea.vmem [#allocation2], %s196
        // Predicated region
        $region29: #{tpu_custom_call.1} parent=27 // pred_check
          %p198 = pneg %p57
        $region30: #{tpu_custom_call.1} parent=27 // pred_check_branch
          %200 = sbr.rel (%p198) target = $region32
        $region31: #{tpu_custom_call.1} parent=27 // pred_region
          %201 = dma.done %s194, 64
        $region32: #{tpu_custom_call.1} parent=27 // pred_fallthru
          _
        // Predicated region
        $region33: #{tpu_custom_call.1} parent=27 // pred_check
          %p202 = pneg %p78
        $region34: #{tpu_custom_call.1} parent=27 // pred_check_branch
          %204 = sbr.rel (%p202) target = $region36
        $region35: #{tpu_custom_call.1} parent=27 // pred_region
          %205 = dma.done [#allocation6], 128
        $region36: #{tpu_custom_call.1} parent=27 // pred_fallthru
          _
        %s206 = sand.u32 %s44, 1
        %s207 = scalar_lea.sflag [#allocation3], %s206
        %s208 = sand.u32 %s44, 1
        %s209 = smul.addr %s208, 4
        %s210 = scalar_lea.vmem [#allocation2], %s209
        %p211 = pneg %p57
        %p212 = pneg %p54
        %p213 = pneg %p78
        %p214 = pneg %p75
        %p215 = pneg %p106
        %p216 = pneg %p103
        %s217 = sand.u32 %s93, 1
        %s218 = scalar_lea.sflag [#allocation4], %s217
        %s219 = sand.u32 %s93, 1
        %s220 = smul.addr %s219, 16
        %s221 = scalar_lea.vmem [#allocation7], %s220
        %p222 = pneg %p134
        %p223 = pneg %p131
        %s224 = sadd.s32 %s26, %s27
        %p225 = scmp.lt.s32.totalorder %s224, 1
        %s226 = scalar_select %p225, %s224, 1
        %s227 = smul.addr %s226, 2
        %s228 = smul.addr %s227, 8
        %s229 = scalar_lea.vmem %s3, %s228
        %s230 = sadd.s32 %s26, %s27
        %s231 = smul.u32 2, %s27
        %s232 = sadd.s32 %s26, %s27
        %p233 = scmp.lt.s32.totalorder %s232, 1
        %s234 = scalar_select %p233, %s232, 1
        %s235 = smul.addr %s234, 2
        %s236 = smul.addr %s235, 8
        %s237 = scalar_lea.vmem %s3, %s236
        %s238 = sadd.s32 %s26, %s27
        %v240 = vld [vmem:[%s197] sm:$0xf]
        %v243 = vunpack.c.l.s4 1983009808
        %v244 = vunpack.c.0.s8 %v243
        %v245 = vlaneseq
        %v246 = vshrl.u32 %v245, 7
        %v247 = vsub.s32 %v244, %v246
        %v248 = vrot.slane %v240, %v247
        %v249 = vcombine.high %v248, %v248
        %v250 = vcombine.low %v240, %v240
        %v252 = vunpack.c.l.s4 1983009808
        %v253 = vunpack.c.0.s8 %v252
        %v254 = vlaneseq
        %v255 = vshrl.u32 %v254, 7
        %v256 = vsub.s32 %v253, %v255
        %v257 = vrot.slane %v250, %v256
        %v258 = vcombine.high %v257, %v257
        %259 = vrot.lane.b32.xlu0 %v257, 127
        %v260 = vpop.permute.xlu0 %259
        %261 = vrot.lane.b32.xlu0 %v258, 127
        %v262 = vpop.permute.xlu0 %261
        %vm263 = vcmask 1039360
        %v264 = vsel %vm263, %v260, %v262
        %v265 = vcombine.low %v248, %v248
        %266 = vrot.lane.b32.xlu0 %v265, 126
        %v267 = vpop.permute.xlu0 %266
        %268 = vrot.lane.b32.xlu0 %v248, 126
        %v269 = vpop.permute.xlu0 %268
        %vm270 = vcmask 1031168
        %v271 = vsel %vm270, %v267, %v269
        %v272 = vcombine.low %v257, %v257
        %273 = vrot.lane.b32.xlu0 %v272, 125
        %v274 = vpop.permute.xlu0 %273
        %275 = vrot.lane.b32.xlu0 %v257, 125
        %v276 = vpop.permute.xlu0 %275
        %vm277 = vcmask 1022976
        %v278 = vsel %vm277, %v274, %v276
        %279 = vrot.lane.b32.xlu0 %v248, 124
        %v280 = vpop.permute.xlu0 %279
        %281 = vrot.lane.b32.xlu0 %v249, 124
        %v282 = vpop.permute.xlu0 %281
        %vm283 = vcmask 1014784
        %v284 = vsel %vm283, %v280, %v282
        %285 = vrot.lane.b32.xlu0 %v257, 123
        %v286 = vpop.permute.xlu0 %285
        %287 = vrot.lane.b32.xlu0 %v258, 123
        %v288 = vpop.permute.xlu0 %287
        %vm289 = vcmask 1006592
        %v290 = vsel %vm289, %v286, %v288
        %291 = vrot.lane.b32.xlu0 %v265, 122
        %v292 = vpop.permute.xlu0 %291
        %293 = vrot.lane.b32.xlu0 %v248, 122
        %v294 = vpop.permute.xlu0 %293
        %vm295 = vcmask 998400
        %v296 = vsel %vm295, %v292, %v294
        %vm297 = vcmask 1041408
        %v300 = vsel %vm297, %v248, %v264
        %v303 = vsel %vm297, %v249, %v262
        %vm304 = vcmask 1043456
        %v306 = vsel %vm304, %v300, %v271
        %v308 = vsel %vm304, %v303, %v269
        %vm309 = vcmask 1045504
        %v311 = vsel %vm309, %v306, %v278
        %v314 = vsel %vm309, %v308, %v276
        %v318 = vsel %vm297, %v284, %v290
        %v321 = vsel %vm297, %v282, %v288
        %v323 = vsel %vm304, %v318, %v296
        %v325 = vsel %vm304, %v321, %v294
        %v326 = vld [vmem:[#allocation5] sm:$0xf]
        %v327 = vld [vmem:[#allocation5 + $0x4] sm:$0xf]
        %v330 = vunpack.c.l.b16 %v326
        %v331 = vunpack.c.l.b16 %v327
        %v332 = vpack.c.b16 %v331, %v330
        %vm333 = vcmask 228352
        %v335 = vsel %vm333, %v332, 0
        %v337 = vsel %vm309, %v323, 0
        %v339 = vsel %vm309, %v325, 0
        %341 = vmatprep.subr.bf16.mxu0 0
        %342 = vmatpush1.bf16.msra.mxu0 0
        %343 = vmatprep.subr.bf16.mxu0 0
        %344 = vmatpush1.bf16.msra.mxu0 0
        %345 = vmatprep.subr.bf16.mxu0 0
        %346 = vmatpush1.bf16.msra.mxu0 0
        %347 = vmatprep.subr.bf16.mxu0 0
        %348 = vmatpush1.bf16.msra.mxu0 0
        %349 = vmatprep.subr.bf16.mxu0 0
        %350 = vmatpush1.bf16.msra.mxu0 0
        %351 = vmatprep.subr.bf16.mxu0 0
        %352 = vmatpush1.bf16.msra.mxu0 0
        %353 = vmatprep.subr.bf16.mxu0 %v339
        %354 = vmatpush1.bf16.msra.mxu0 %v337
        %355 = vmatprep.subr.bf16.mxu0 %v314
        %356 = vmatpush1.bf16.msra.mxu0 %v311
        %357 = vmatprep.subr.bf16.mxu0 0
        %358 = vmatpush2.bf16.msra.mxu0 0
        %359 = vmatprep.subr.bf16.mxu0 0
        %360 = vmatpush2.bf16.msra.mxu0 0
        %361 = vmatprep.subr.bf16.mxu0 0
        %362 = vmatpush2.bf16.msra.mxu0 0
        %363 = vmatprep.subr.bf16.mxu0 0
        %364 = vmatpush2.bf16.msra.mxu0 0
        %365 = vmatprep.subr.bf16.mxu0 0
        %366 = vmatpush2.bf16.msra.mxu0 0
        %367 = vmatprep.subr.bf16.mxu0 0
        %368 = vmatpush2.bf16.msra.mxu0 0
        %369 = vmatprep.subr.bf16.mxu0 0
        %370 = vmatpush2.bf16.msra.mxu0 0
        %371 = vmatprep.subr.bf16.mxu0 0
        %372 = vmatpush2.bf16.msra.mxu0 0
        %373 = vmatprep.mubr.bf16.mxu0 0
        %374 = vmatmul.mubr.bf16.gmra.mxu0 %v335
        %v375 = vpop.f32.mrf.mxu0
        %v376 = vadd.f32 0.0, %v375
        %v377 = vpop.f32.mrf.mxu0
        %v378 = vadd.f32 0.0, %v377
        %v379 = vpop.f32.mrf.mxu0
        %v380 = vadd.f32 0.0, %v379
        %v381 = vpop.f32.mrf.mxu0
        %v382 = vadd.f32 0.0, %v381
        %383 = vdwg.mxu0
        %v384 = vpack.c.bf16 %v380, %v376
        %v385 = vpack.c.bf16 %v382, %v378
        %v388 = vunpack.c.l.b16 %v384
        %v389 = vunpack.c.l.b16 %v385
        %v390 = vunpack.c.h.b16 %v384
        %v391 = vunpack.c.h.b16 %v385
        %v392 = vpack.c.b16 %v389, %v388
        %v393 = vpack.c.b16 %v391, %v390
        %vm396 = vcmask 916484
        %vm397 = vmor %vm396, %vm304
        %398 = vst.msk [vmem:[%s221] sm:$0xff] %vm397, %v392
        %399 = vst.msk [vmem:[%s221 + $0x8] sm:$0xff] %vm397, %v393
        %vm400 = vcmask 916480
        %v401 = vsel %vm400, %v378, 0.0
        %v402 = vadd.f32 %v376, %v401
        %403 = vadd.xlane.f32.xlu0 %v402
        %v404 = vpop.xlane.xlu0 %403
        %v405 = vsel %vm400, %v382, 0.0
        %v406 = vadd.f32 %v380, %v405
        %407 = vadd.xlane.f32.xlu0 %v406
        %v408 = vpop.xlane.xlu0 %407
        %v409 = vmul.f32 %v376, %v376
        %v410 = vmul.f32 %v378, %v378
        %v411 = vmul.f32 %v380, %v380
        %v412 = vmul.f32 %v382, %v382
        %v413 = vsel %vm400, %v410, 0.0
        %v414 = vadd.f32 %v409, %v413
        %415 = vadd.xlane.f32.xlu0 %v414
        %v416 = vpop.xlane.xlu0 %415
        %v417 = vsel %vm400, %v412, 0.0
        %v418 = vadd.f32 %v411, %v417
        %419 = vadd.xlane.f32.xlu0 %v418
        %v420 = vpop.xlane.xlu0 %419
        %vm421 = vcmask 7168
        %v422 = vsel %vm421, %v404, %v416
        %v423 = vsel %vm421, %v408, %v420
        %vm424 = vcmask 15360
        %425 = vst.msk [vmem:[%s237] sm:$0xff] %vm424, %v422
        %426 = vst.msk [vmem:[%s237 + $0x8] sm:$0xff] %vm424, %v423
        %s427 = sand.u32 %s93, 1
        %s428 = scalar_lea.sflag [#allocation4], %s427
        %s429 = sand.u32 %s93, 1
        %s430 = smul.addr %s429, 16
        %s431 = scalar_lea.vmem [#allocation7], %s430
        %s432 = sadd.s32 %s26, %s27
        %p433 = scmp.lt.s32.totalorder %s432, 1
        %s434 = scalar_select %p433, %s432, 1
        %s435 = smul.addr %s434, 2
        %s436 = smul.addr %s435, 8
        %s437 = scalar_lea.vmem %s3, %s436
        // Predicated region
        $region37: #{tpu_custom_call.1} parent=27 // pred_check
          %p438 = pneg %p103
        $region38: #{tpu_custom_call.1} parent=27 // pred_check_branch
          %440 = sbr.rel (%p438) target = $region40
        $region39: #{tpu_custom_call.1} parent=27 // pred_region
          %s441 = smul.u32 2, %s27
          %s443 = ssub.s32 256, 256
          %444 = vsyncadd %s428, %s443
          %s445 = smul.addr %s26, 4
          %s446 = sadd.s32 %s441, %s445
          %s447 = smul.addr %s446, 64
          %s448 = scalar_lea.hbm %s2, %s447
          %s449 = sshll.u32 %s431, 4
          %s450 = int_to_ptr.vmem [resolvable:$true] %s449
          %455 = dma.vmem_to_hbm [thread:$0]  %s450, 256, %s448, %s428, 128, 128, 8
        $region40: #{tpu_custom_call.1} parent=27 // pred_fallthru
          _
        // Predicated region
        $region41: #{tpu_custom_call.1} parent=27 // pred_check
          %p456 = pneg %p131
        $region42: #{tpu_custom_call.1} parent=27 // pred_check_branch
          %458 = sbr.rel (%p456) target = $region44
        $region43: #{tpu_custom_call.1} parent=27 // pred_region
          %s459 = sadd.s32 %s26, %s27
        $region44: #{tpu_custom_call.1} parent=27 // pred_fallthru
          _
      $region28: #{tpu_custom_call.1} parent=5 // pred_fallthru
        _
      %p460 = scmp.le.s32.totalorder 2, %s17
      // Predicated region
      $region45: #{tpu_custom_call.1} parent=5 // pred_check
        %p461 = pneg %p460
      $region46: #{tpu_custom_call.1} parent=5 // pred_check_branch
        %463 = sbr.rel (%p461) target = $region48
      $region47: #{tpu_custom_call.1} parent=5 // pred_region
        %s464 = ssub.s32 %s17, 2
        // Predicated region
        $region49: #{tpu_custom_call.1} parent=47 // pred_check
          %p465 = pneg %p109
        $region50: #{tpu_custom_call.1} parent=47 // pred_check_branch
          %467 = sbr.rel (%p465) target = $region52
        $region51: #{tpu_custom_call.1} parent=47 // pred_region
          %s468 = sand.u32 %s94, 1
          %s469 = scalar_lea.sflag [#allocation4], %s468
          %s470 = sand.u32 %s94, 1
          %s471 = smul.addr %s470, 16
          %s472 = scalar_lea.vmem [#allocation7], %s471
          %473 = dma.done %s469, 256
        $region52: #{tpu_custom_call.1} parent=47 // pred_fallthru
          _
        // Predicated region
        $region53: #{tpu_custom_call.1} parent=47 // pred_check
          %p474 = pneg %p137
        $region54: #{tpu_custom_call.1} parent=47 // pred_check_branch
          %476 = sbr.rel (%p474) target = $region56
        $region55: #{tpu_custom_call.1} parent=47 // pred_region
          %s477 = sadd.s32 %s28, %s29
          %p478 = scmp.lt.s32.totalorder %s477, 1
          %s479 = scalar_select %p478, %s477, 1
          %s480 = smul.addr %s479, 2
          %s481 = smul.addr %s480, 8
          %s482 = scalar_lea.vmem %s3, %s481
        $region56: #{tpu_custom_call.1} parent=47 // pred_fallthru
          _
      $region48: #{tpu_custom_call.1} parent=5 // pred_fallthru
        _
    $region6: #{tpu_custom_call.1} parent=1 // loop_footer
      %s21 = sadd.s32 1, %s17
    $region7: #{tpu_custom_call.1} parent=1 // loop_footer_branch
      %16 = sbr.rel target = $region3
    $region8: #{tpu_custom_call.1} parent=1 // loop_exit
      _
    %483 = vsyncpa [#allocation3], 1
    %s484 = scalar_lea.sflag [#allocation3], 1
    %485 = vsyncpa %s484, 1
    %486 = vsyncpa [#allocation6], 1
    %487 = vsyncpa [#allocation4], 1
    %s488 = scalar_lea.sflag [#allocation4], 1
    %489 = vsyncpa %s488, 1

</llo_original>
